<compile_context>
chip_gen: v6e
topology: v6e:2x2x1
jax: 0.10.0
libtpu: 0.0.40
codegen_flags: <defaults>
</compile_context>

<pallas_src>
import functools

import jax
import jax.numpy as jnp
from jax import lax
from jax.experimental import pallas as pl
from jax.experimental.pallas import tpu as pltpu


def _round_up(x: int, m: int) -> int:
    return ((x + m - 1) // m) * m


def _pad_to(x, target_shape):
    pads = [(0, t - s) for s, t in zip(x.shape, target_shape)]
    if all(p == (0, 0) for p in pads):
        return x
    return jnp.pad(x, pads)


def _compat_kernel(k_ref, q_ref, adj_ref, wk_ref, wq_ref, o_ref, *, kq_dim, clip):
    # Block refs:
    #   k_ref : (TB, Nk_p, Dk)      q_ref : (TB, Nq_p, Dq)
    #   adj_ref/o_ref : (TB, Nq_p, Nk_p)
    #   wk_ref: (Dk, kq)            wq_ref: (Dq, kq)
    tb, nk, dk = k_ref.shape
    _, nq, dq = q_ref.shape
    kq = wk_ref.shape[-1]

    # Flattened projection matmuls: one MXU call per projection for the whole
    # batch block (merging (TB, N) is layout-free since N is 8-aligned).
    k_proj = jnp.dot(
        k_ref[...].reshape(tb * nk, dk), wk_ref[...],
        preferred_element_type=jnp.float32,
    ).reshape(tb, nk, kq)
    q_proj = jnp.dot(
        q_ref[...].reshape(tb * nq, dq), wq_ref[...],
        preferred_element_type=jnp.float32,
    ).reshape(tb, nq, kq)

    inv_scale = 1.0 / jnp.sqrt(jnp.float32(kq_dim))
    # Batched q @ k^T: contract over kq with no explicit transpose/relayout.
    compat = lax.dot_general(
        q_proj, k_proj,
        dimension_numbers=(((2,), (2,)), ((0,), (0,))),
        preferred_element_type=jnp.float32,
    ) * inv_scale                                            # (TB, Nq_p, Nk_p)

    adj_on = adj_ref[...] != 0.0
    if clip is not None:
        # tanh bounds compat to [-clip, clip] -> exp cannot overflow, so skip
        # the row-max reduce and mask by zeroing the exponentials. Zero-padded
        # adjacency columns (Nk padding) drop out here as well.
        compat = jnp.tanh(compat) * jnp.float32(clip)
        e = jnp.where(adj_on, jnp.exp(compat), 0.0)
    else:
        # Unbounded logits: keep the numerically-safe max-subtracted softmax.
        masked = jnp.where(adj_on, compat, -jnp.inf)
        m = jnp.max(masked, axis=-1, keepdims=True)
        e = jnp.exp(masked - m)

    s = jnp.sum(e, axis=-1, keepdims=True)
    # Exact reciprocal keeps bit-level agreement with the f32 reference;
    # approx=True (EUP slot) is available when a ~1e-4 tolerance is fine.
    o_ref[...] = e * pl.reciprocal(s, approx=False)


def compatibility_forward(k_inputs, q_inputs, adjancy, wk, wq, *,
                          kq_dim, clip=10.0, batch_block=None):
    B, Nk, Dk = k_inputs.shape
    _, Nq, Dq = q_inputs.shape
    assert adjancy.shape == (B, Nq, Nk)
    assert wk.shape == (Dk, kq_dim) and wq.shape == (Dq, kq_dim)

    # Batch block size: amortize per-grid-step overhead while keeping at least
    # two grid steps when B >= 2 (so a "parallel" axis can span both v7x TCs).
    if batch_block is None:
        batch_block = 1 if B <= 2 else min(8, B // 2)
    tb = max(1, min(int(batch_block), B))

    # Lane/sublane-friendly padding:
    #   Nk -> multiple of 128 (lane-dense adjacency loads / output stores)
    #   Nq -> multiple of 8   (sublane granule)
    #   B  -> multiple of tb  (uniform batch blocks; padded rows are sliced off)
    nk_p = _round_up(Nk, 128)
    nq_p = _round_up(Nq, 8)
    b_p = _round_up(B, tb)

    k_in = _pad_to(k_inputs.astype(jnp.float32), (b_p, nk_p, Dk))
    q_in = _pad_to(q_inputs.astype(jnp.float32), (b_p, nq_p, Dq))
    adj = _pad_to(adjancy.astype(jnp.float32), (b_p, nq_p, nk_p))  # 0 == masked

    kernel = functools.partial(_compat_kernel, kq_dim=kq_dim, clip=clip)

    out = pl.pallas_call(
        kernel,
        out_shape=jax.ShapeDtypeStruct((b_p, nq_p, nk_p), jnp.float32),
        grid_spec=pltpu.PrefetchScalarGridSpec(
            num_scalar_prefetch=0,
            grid=(b_p // tb,),
            in_specs=[
                pl.BlockSpec((tb, nk_p, Dk), lambda b: (b, 0, 0)),    # k_inputs
                pl.BlockSpec((tb, nq_p, Dq), lambda b: (b, 0, 0)),    # q_inputs
                pl.BlockSpec((tb, nq_p, nk_p), lambda b: (b, 0, 0)),  # adjancy
                pl.BlockSpec((Dk, kq_dim), lambda b: (0, 0)),         # key weights
                pl.BlockSpec((Dq, kq_dim), lambda b: (0, 0)),         # query weights
            ],
            out_specs=pl.BlockSpec((tb, nq_p, nk_p), lambda b: (b, 0, 0)),
        ),
        compiler_params=pltpu.CompilerParams(
            dimension_semantics=("parallel",),
        ),
    )(k_in, q_in, adj, wk, wq)

    # Strip batch / Nq / Nk padding back to the caller's shapes.
    return out[:B, :Nq, :Nk]


if __name__ == "__main__":
    # Small shapes consistent with the module; B=4 exercises batch blocking
    # (tb=2, two parallel grid steps).
    B, Nq, Nk = 4, 8, 8
    k_in_dim, q_in_dim, kq_dim = 16, 16, 32
    clip = 10.0

    key = jax.random.PRNGKey(0)
    k0, k1, k2, k3, k4 = jax.random.split(key, 5)

    # Deterministic parameter init mirroring Linear: (rand - 0.5) * 0.05, no bias.
    wk = (jax.random.uniform(k0, (k_in_dim, kq_dim), jnp.float32) - 0.5) * 0.05
    wq = (jax.random.uniform(k1, (q_in_dim, kq_dim), jnp.float32) - 0.5) * 0.05

    k_inputs = jax.random.normal(k2, (B, Nk, k_in_dim), jnp.float32)
    q_inputs = jax.random.normal(k3, (B, Nq, q_in_dim), jnp.float32)

    # Random adjacency, with the diagonal forced on so every row has at least
    # one valid entry (all-masked rows are NaN in both torch and this kernel).
    adj = (jax.random.uniform(k4, (B, Nq, Nk)) > 0.5).astype(jnp.float32)
    eye = jnp.broadcast_to(jnp.eye(Nq, Nk, dtype=jnp.float32), (B, Nq, Nk))
    adjancy = jnp.maximum(adj, eye)

    out = compatibility_forward(
        k_inputs, q_inputs, adjancy, wk, wq, kq_dim=kq_dim, clip=clip
    )
    out = jax.block_until_ready(out)

    # Pure-JAX reference check (mirrors the torch forward).
    k_proj = k_inputs @ wk
    q_proj = q_inputs @ wq
    comp = jnp.einsum("bqd,bkd->bqk", q_proj, k_proj) / jnp.sqrt(jnp.float32(kq_dim))
    comp = jnp.tanh(comp) * clip
    comp = jnp.where(adjancy != 0.0, comp, -jnp.inf)
    ref = jax.nn.softmax(comp, axis=2)

    assert out.shape == (B, Nq, Nk)
    assert jnp.allclose(out, ref, atol=1e-5, rtol=1e-5)
    print("KERNEL_OK")
</pallas_src>

<mosaic_0001>
module attributes {stable_mosaic.version = 11 : i64} {
  func.func @_compat_kernel(%arg0: i32, %arg1: memref<2x128x16xf32, #tpu.memory_space<vmem>>, %arg2: memref<2x8x16xf32, #tpu.memory_space<vmem>>, %arg3: memref<2x8x128xf32, #tpu.memory_space<vmem>>, %arg4: memref<16x32xf32, #tpu.memory_space<vmem>>, %arg5: memref<16x32xf32, #tpu.memory_space<vmem>>, %arg6: memref<2x8x128xf32, #tpu.memory_space<vmem>>) attributes {dimension_semantics = [#tpu.dimension_semantics<parallel>], iteration_bounds = array<i64: 2>, scalar_prefetch = 0 : i64, scratch_operands = 0 : i64, tpu.core_type = #tpu.core_type<tc>, window_params = [{transform_indices = @transform_0, window_bounds = array<i64: 2, 128, 16>}, {transform_indices = @transform_1, window_bounds = array<i64: 2, 8, 16>}, {transform_indices = @transform_2, window_bounds = array<i64: 2, 8, 128>}, {pipeline_mode = #tpu.pipeline_mode<synchronous>, transform_indices = @transform_3, window_bounds = array<i64: 16, 32>}, {pipeline_mode = #tpu.pipeline_mode<synchronous>, transform_indices = @transform_4, window_bounds = array<i64: 16, 32>}, {transform_indices = @transform_5, window_bounds = array<i64: 2, 8, 128>}]} {
    %c0 = arith.constant 0 : index
    %c0_0 = arith.constant 0 : index
    %c0_1 = arith.constant 0 : index
    %0 = vector.load %arg1[%c0, %c0_0, %c0_1] : memref<2x128x16xf32, #tpu.memory_space<vmem>>, vector<2x128x16xf32>
    %1 = vector.shape_cast %0 : vector<2x128x16xf32> to vector<256x16xf32>
    %c0_2 = arith.constant 0 : index
    %c0_3 = arith.constant 0 : index
    %2 = vector.load %arg4[%c0_2, %c0_3] : memref<16x32xf32, #tpu.memory_space<vmem>>, vector<16x32xf32>
    %cst = arith.constant dense<0.000000e+00> : vector<256x32xf32>
    %3 = tpu.matmul %1, %2, %cst {dimension_numbers = #tpu.dot_dimension_numbers<[1], [0], [0], [1], [0, 0, 1, 1], [], []>} : vector<256x16xf32>, vector<16x32xf32>, vector<256x32xf32> -> vector<256x32xf32>
    %4 = vector.shape_cast %3 : vector<256x32xf32> to vector<2x128x32xf32>
    %c0_4 = arith.constant 0 : index
    %c0_5 = arith.constant 0 : index
    %c0_6 = arith.constant 0 : index
    %5 = vector.load %arg2[%c0_4, %c0_5, %c0_6] : memref<2x8x16xf32, #tpu.memory_space<vmem>>, vector<2x8x16xf32>
    %6 = vector.shape_cast %5 : vector<2x8x16xf32> to vector<16x16xf32>
    %c0_7 = arith.constant 0 : index
    %c0_8 = arith.constant 0 : index
    %7 = vector.load %arg5[%c0_7, %c0_8] : memref<16x32xf32, #tpu.memory_space<vmem>>, vector<16x32xf32>
    %cst_9 = arith.constant dense<0.000000e+00> : vector<16x32xf32>
    %8 = tpu.matmul %6, %7, %cst_9 {dimension_numbers = #tpu.dot_dimension_numbers<[1], [0], [0], [1], [0, 0, 1, 1], [], []>} : vector<16x16xf32>, vector<16x32xf32>, vector<16x32xf32> -> vector<16x32xf32>
    %9 = vector.shape_cast %8 : vector<16x32xf32> to vector<2x8x32xf32>
    %cst_10 = arith.constant 3.200000e+01 : f32
    %10 = math.sqrt %cst_10 : f32
    %cst_11 = arith.constant 1.000000e+00 : f32
    %11 = arith.divf %cst_11, %10 : f32
    %cst_12 = arith.constant dense<0.000000e+00> : vector<2x8x128xf32>
    %12 = tpu.matmul %9, %4, %cst_12 {dimension_numbers = #tpu.dot_dimension_numbers<[2], [2], [1], [1], [0, 0, 0, 1, 1, 1], [0], [0]>} : vector<2x8x32xf32>, vector<2x128x32xf32>, vector<2x8x128xf32> -> vector<2x8x128xf32>
    %13 = vector.broadcast %11 : f32 to vector<2x8x128xf32>
    %14 = arith.mulf %12, %13 : vector<2x8x128xf32>
    %c0_13 = arith.constant 0 : index
    %c0_14 = arith.constant 0 : index
    %c0_15 = arith.constant 0 : index
    %15 = vector.load %arg3[%c0_13, %c0_14, %c0_15] : memref<2x8x128xf32, #tpu.memory_space<vmem>>, vector<2x8x128xf32>
    %cst_16 = arith.constant 0.000000e+00 : f32
    %16 = vector.broadcast %cst_16 : f32 to vector<2x8x128xf32>
    %17 = arith.cmpf one, %15, %16 : vector<2x8x128xf32>
    %18 = math.tanh %14 : vector<2x8x128xf32>
    %cst_17 = arith.constant 1.000000e+01 : f32
    %19 = vector.broadcast %cst_17 : f32 to vector<2x8x128xf32>
    %20 = arith.mulf %18, %19 : vector<2x8x128xf32>
    %21 = math.exp %20 : vector<2x8x128xf32>
    %cst_18 = arith.constant 0.000000e+00 : f32
    %22 = vector.broadcast %cst_18 : f32 to vector<2x8x128xf32>
    %23 = arith.select %17, %21, %22 : vector<2x8x128xi1>, vector<2x8x128xf32>
    %cst_19 = arith.constant dense<0.000000e+00> : vector<2x8xf32>
    %24 = vector.multi_reduction <add>, %23, %cst_19 [2] : vector<2x8x128xf32> to vector<2x8xf32>
    %25 = vector.shape_cast %24 : vector<2x8xf32> to vector<2x8x1xf32>
    %26 = tpu.reciprocal %25 : vector<2x8x1xf32> -> vector<2x8x1xf32>
    %27 = vector.broadcast %26 : vector<2x8x1xf32> to vector<2x8x128xf32>
    %28 = arith.mulf %23, %27 : vector<2x8x128xf32>
    %c0_20 = arith.constant 0 : index
    %c0_21 = arith.constant 0 : index
    %c0_22 = arith.constant 0 : index
    %29 = vector.load %arg6[%c0_20, %c0_21, %c0_22] : memref<2x8x128xf32, #tpu.memory_space<vmem>>, vector<2x8x128xf32>
    tpu.vector_store %arg6[%c0_20, %c0_21, %c0_22], %28 {strides = array<i32>} : memref<2x8x128xf32, #tpu.memory_space<vmem>>, vector<2x8x128xf32>,
    return
  }
  func.func @transform_0(%arg0: i32) -> (i32, i32, i32) {
    %c0_i32 = arith.constant 0 : i32
    %c0_i32_0 = arith.constant 0 : i32
    %c0_i32_1 = arith.constant 0 : i32
    return %arg0, %c0_i32, %c0_i32_0 : i32, i32, i32
  }
  func.func @transform_1(%arg0: i32) -> (i32, i32, i32) {
    %c0_i32 = arith.constant 0 : i32
    %c0_i32_0 = arith.constant 0 : i32
    %c0_i32_1 = arith.constant 0 : i32
    return %arg0, %c0_i32, %c0_i32_0 : i32, i32, i32
  }
  func.func @transform_2(%arg0: i32) -> (i32, i32, i32) {
    %c0_i32 = arith.constant 0 : i32
    %c0_i32_0 = arith.constant 0 : i32
    %c0_i32_1 = arith.constant 0 : i32
    return %arg0, %c0_i32, %c0_i32_0 : i32, i32, i32
  }
  func.func @transform_3(%arg0: i32) -> (i32, i32) {
    %c0_i32 = arith.constant 0 : i32
    %c0_i32_0 = arith.constant 0 : i32
    %c0_i32_1 = arith.constant 0 : i32
    return %c0_i32, %c0_i32_0 : i32, i32
  }
  func.func @transform_4(%arg0: i32) -> (i32, i32) {
    %c0_i32 = arith.constant 0 : i32
    %c0_i32_0 = arith.constant 0 : i32
    %c0_i32_1 = arith.constant 0 : i32
    return %c0_i32, %c0_i32_0 : i32, i32
  }
  func.func @transform_5(%arg0: i32) -> (i32, i32, i32) {
    %c0_i32 = arith.constant 0 : i32
    %c0_i32_0 = arith.constant 0 : i32
    %c0_i32_1 = arith.constant 0 : i32
    return %arg0, %c0_i32, %c0_i32_0 : i32, i32, i32
  }
}

</mosaic_0001>

<llo_original>
// kernel: tpu_custom_call.1
$region0: #{tpu_custom_call.1}
  #allocation0 [shape = 'u32[]', space=smem, size = 0x4, offset = 0x4, fixed_abs, tag = 'smem constant byte address 0x4 - core index']
  #allocation1 [shape = 'u32[144,128]{1,0:T(1,128)}', space=vmem, size = 0x12000, scoped, tag = 'internal scratch']
  %s0 = inlined_call_operand.vmem [shape: f32[4,128,16], index: 0, kind: input, shape index: {}]
  %s1 = inlined_call_operand.vmem [shape: f32[4,8,16], index: 1, kind: input, shape index: {}]
  %s2 = inlined_call_operand.vmem [shape: f32[4,8,128], index: 2, kind: input, shape index: {}]
  %s3 = inlined_call_operand.vmem [shape: f32[16,32], index: 3, kind: input, shape index: {}]
  %s4 = inlined_call_operand.vmem [shape: f32[16,32], index: 4, kind: input, shape index: {}]
  %s5 = inlined_call_operand.hbm [shape: f32[4,8,128], index: 5, kind: output, shape index: {}]
  %s6 = sld [smem:[#allocation0]]
  $region53: #{tpu_custom_call.1} parent=0
    _
  %s8 = ssub.s32 1, %s6
  %s9 = scalar_select 0, %s8, %s6
  $region1: #{tpu_custom_call.1} parent=0
    #allocation2 [shape = 'u8[16384]{0}', space=vmem, size = 0x4000, scoped, tag = 'output window, operand 0']
    #allocation3 [shape = 's32[2]{0}', space=sflag, size = 0x8, scoped, tag = 'scoped memory for tpu_custom_call.1']
    %10 = vsyncpa [#allocation3], 0
    %s11 = scalar_lea.sflag [#allocation3], 1
    %12 = vsyncpa %s11, 0
    loop: start=0, step=1, limit=4
    $region2: #{tpu_custom_call.1} parent=1 // loop_pre_header
      _
    $region3: #{tpu_custom_call.1} parent=1 // loop_header
      %s14 = sphi 0, %s18
      %p15 = scmp.ge.s32.totalorder %s14, 4
      %s24 = sphi 0, %s26
      %s27 = sphi 0, %s24
      %s28 = sphi 0, %s27
      %s44 = sphi 0, %s28
      %s50 = sphi 0, %s52
      %s53 = sphi 0, %s50
      %s54 = sphi 0, %s53
      %s70 = sphi 0, %s54
      %s76 = sphi 0, %s78
      %s79 = sphi 0, %s76
      %s80 = sphi 0, %s79
      %s96 = sphi 0, %s80
      %s100 = sphi 0, %s100
      %s102 = sphi 0, %s100
      %s103 = sphi 0, %s102
      %s117 = sphi 0, %s103
      %s121 = sphi 0, %s121
      %s123 = sphi 0, %s121
      %s124 = sphi 0, %s123
      %s138 = sphi 0, %s124
      %s144 = sphi 0, %s146
      %s147 = sphi 0, %s144
      %s148 = sphi 0, %s147
      %s164 = sphi 0, %s148
    $region4: #{tpu_custom_call.1} parent=1 // loop_header_branch
      %17 = sbr.rel (%p15) target = $region8
    $region5: #{tpu_custom_call.1} parent=1 // loop_body
      %s19 = ssub.s32 %s14, 1
      %s20 = ssub.s32 %s14, 2
      %s21 = sadd.s32 %s14, 1
      %s22 = ssub.s32 %s14, %s21
      %p23 = scmp.eq.s32.totalorder %s22, 0
      %s25 = sadd.s32 %s24, 1
      %s26 = scalar_select %p23, %s24, %s25
      %p29 = pneg %p23
      %p30 = scmp.eq.s32.totalorder %s14, 1
      %p31 = por %p29, %p30
      %p32 = scmp.ne.s32.totalorder %s24, %s27
      %p33 = scmp.eq.s32.totalorder %s14, 0
      %p34 = por %p32, %p33
      %p35 = scmp.ne.s32.totalorder %s24, %s27
      %p36 = scmp.eq.s32.totalorder %s19, 1
      %p37 = por %p35, %p36
      %p38 = scmp.ne.s32.totalorder %s27, %s28
      %p39 = scmp.eq.s32.totalorder %s19, 0
      %p40 = por %p38, %p39
      %p41 = scmp.ne.s32.totalorder %s27, %s28
      %p42 = scmp.eq.s32.totalorder %s20, 1
      %p43 = por %p41, %p42
      %p45 = scmp.ne.s32.totalorder %s28, %s44
      %p46 = scmp.eq.s32.totalorder %s20, 0
      %p47 = por %p45, %p46
      %s48 = ssub.s32 %s14, %s21
      %p49 = scmp.eq.s32.totalorder %s48, 0
      %s51 = sadd.s32 %s50, 1
      %s52 = scalar_select %p49, %s50, %s51
      %p55 = pneg %p49
      %p56 = scmp.eq.s32.totalorder %s14, 1
      %p57 = por %p55, %p56
      %p58 = scmp.ne.s32.totalorder %s50, %s53
      %p59 = scmp.eq.s32.totalorder %s14, 0
      %p60 = por %p58, %p59
      %p61 = scmp.ne.s32.totalorder %s50, %s53
      %p62 = scmp.eq.s32.totalorder %s19, 1
      %p63 = por %p61, %p62
      %p64 = scmp.ne.s32.totalorder %s53, %s54
      %p65 = scmp.eq.s32.totalorder %s19, 0
      %p66 = por %p64, %p65
      %p67 = scmp.ne.s32.totalorder %s53, %s54
      %p68 = scmp.eq.s32.totalorder %s20, 1
      %p69 = por %p67, %p68
      %p71 = scmp.ne.s32.totalorder %s54, %s70
      %p72 = scmp.eq.s32.totalorder %s20, 0
      %p73 = por %p71, %p72
      %s74 = ssub.s32 %s14, %s21
      %p75 = scmp.eq.s32.totalorder %s74, 0
      %s77 = sadd.s32 %s76, 1
      %s78 = scalar_select %p75, %s76, %s77
      %p81 = pneg %p75
      %p82 = scmp.eq.s32.totalorder %s14, 1
      %p83 = por %p81, %p82
      %p84 = scmp.ne.s32.totalorder %s76, %s79
      %p85 = scmp.eq.s32.totalorder %s14, 0
      %p86 = por %p84, %p85
      %p87 = scmp.ne.s32.totalorder %s76, %s79
      %p88 = scmp.eq.s32.totalorder %s19, 1
      %p89 = por %p87, %p88
      %p90 = scmp.ne.s32.totalorder %s79, %s80
      %p91 = scmp.eq.s32.totalorder %s19, 0
      %p92 = por %p90, %p91
      %p93 = scmp.ne.s32.totalorder %s79, %s80
      %p94 = scmp.eq.s32.totalorder %s20, 1
      %p95 = por %p93, %p94
      %p97 = scmp.ne.s32.totalorder %s80, %s96
      %p98 = scmp.eq.s32.totalorder %s20, 0
      %p99 = por %p97, %p98
      %s101 = sadd.s32 %s100, 1
      %p104 = scmp.eq.s32.totalorder %s14, 1
      %p105 = scmp.ne.s32.totalorder %s100, %s102
      %p106 = scmp.eq.s32.totalorder %s14, 0
      %p107 = por %p105, %p106
      %p108 = scmp.ne.s32.totalorder %s100, %s102
      %p109 = scmp.eq.s32.totalorder %s19, 1
      %p110 = por %p108, %p109
      %p111 = scmp.ne.s32.totalorder %s102, %s103
      %p112 = scmp.eq.s32.totalorder %s19, 0
      %p113 = por %p111, %p112
      %p114 = scmp.ne.s32.totalorder %s102, %s103
      %p115 = scmp.eq.s32.totalorder %s20, 1
      %p116 = por %p114, %p115
      %p118 = scmp.ne.s32.totalorder %s103, %s117
      %p119 = scmp.eq.s32.totalorder %s20, 0
      %p120 = por %p118, %p119
      %s122 = sadd.s32 %s121, 1
      %p125 = scmp.eq.s32.totalorder %s14, 1
      %p126 = scmp.ne.s32.totalorder %s121, %s123
      %p127 = scmp.eq.s32.totalorder %s14, 0
      %p128 = por %p126, %p127
      %p129 = scmp.ne.s32.totalorder %s121, %s123
      %p130 = scmp.eq.s32.totalorder %s19, 1
      %p131 = por %p129, %p130
      %p132 = scmp.ne.s32.totalorder %s123, %s124
      %p133 = scmp.eq.s32.totalorder %s19, 0
      %p134 = por %p132, %p133
      %p135 = scmp.ne.s32.totalorder %s123, %s124
      %p136 = scmp.eq.s32.totalorder %s20, 1
      %p137 = por %p135, %p136
      %p139 = scmp.ne.s32.totalorder %s124, %s138
      %p140 = scmp.eq.s32.totalorder %s20, 0
      %p141 = por %p139, %p140
      %s142 = ssub.s32 %s14, %s21
      %p143 = scmp.eq.s32.totalorder %s142, 0
      %s145 = sadd.s32 %s144, 1
      %s146 = scalar_select %p143, %s144, %s145
      %p149 = pneg %p143
      %p150 = scmp.eq.s32.totalorder %s14, 1
      %p151 = por %p149, %p150
      %p152 = scmp.ne.s32.totalorder %s144, %s147
      %p153 = scmp.eq.s32.totalorder %s14, 0
      %p154 = por %p152, %p153
      %p155 = scmp.ne.s32.totalorder %s144, %s147
      %p156 = scmp.eq.s32.totalorder %s19, 1
      %p157 = por %p155, %p156
      %p158 = scmp.ne.s32.totalorder %s147, %s148
      %p159 = scmp.eq.s32.totalorder %s19, 0
      %p160 = por %p158, %p159
      %p161 = scmp.ne.s32.totalorder %s147, %s148
      %p162 = scmp.eq.s32.totalorder %s20, 1
      %p163 = por %p161, %p162
      %p165 = scmp.ne.s32.totalorder %s148, %s164
      %p166 = scmp.eq.s32.totalorder %s20, 0
      %p167 = por %p165, %p166
      %p168 = scmp.le.s32.totalorder 1, %s14
      %p169 = scmp.lt.s32.totalorder %s14, 3
      %p170 = pnand %p168, %p169
      %p171 = pneg %p170
      // Predicated region
      $region9: #{tpu_custom_call.1} parent=5 // pred_check
        _
      $region10: #{tpu_custom_call.1} parent=5 // pred_check_branch
        %173 = sbr.rel (%p170) target = $region12
      $region11: #{tpu_custom_call.1} parent=5 // pred_region
        %s174 = ssub.s32 %s14, 1
        // Predicated region
        $region13: #{tpu_custom_call.1} parent=11 // pred_check
          %p175 = pneg %p113
        $region14: #{tpu_custom_call.1} parent=11 // pred_check_branch
          %177 = sbr.rel (%p175) target = $region16
        $region15: #{tpu_custom_call.1} parent=11 // pred_region
          _
        $region16: #{tpu_custom_call.1} parent=11 // pred_fallthru
          _
        // Predicated region
        $region17: #{tpu_custom_call.1} parent=11 // pred_check
          %p178 = pneg %p134
        $region18: #{tpu_custom_call.1} parent=11 // pred_check_branch
          %180 = sbr.rel (%p178) target = $region20
        $region19: #{tpu_custom_call.1} parent=11 // pred_region
          _
        $region20: #{tpu_custom_call.1} parent=11 // pred_fallthru
          _
      $region12: #{tpu_custom_call.1} parent=5 // pred_fallthru
        _
      %p181 = scmp.lt.s32.totalorder %s14, 2
      // Predicated region
      $region21: #{tpu_custom_call.1} parent=5 // pred_check
        %p182 = pneg %p181
      $region22: #{tpu_custom_call.1} parent=5 // pred_check_branch
        %184 = sbr.rel (%p182) target = $region24
      $region23: #{tpu_custom_call.1} parent=5 // pred_region
        // Predicated region
        $region25: #{tpu_custom_call.1} parent=23 // pred_check
          %p185 = pneg %p34
        $region26: #{tpu_custom_call.1} parent=23 // pred_check_branch
          %187 = sbr.rel (%p185) target = $region28
        $region27: #{tpu_custom_call.1} parent=23 // pred_region
          %s188 = smul.u32 2, %s14
          %p189 = scmp.lt.s32.totalorder %s188, 3
          %s190 = scalar_select %p189, %s188, 3
          %s191 = smul.addr %s190, 16
          %s192 = smul.addr %s191, 8
          %s193 = scalar_lea.vmem %s0, %s192
          %s194 = smul.u32 2, %s14
        $region28: #{tpu_custom_call.1} parent=23 // pred_fallthru
          _
        // Predicated region
        $region29: #{tpu_custom_call.1} parent=23 // pred_check
          %p195 = pneg %p60
        $region30: #{tpu_custom_call.1} parent=23 // pred_check_branch
          %197 = sbr.rel (%p195) target = $region32
        $region31: #{tpu_custom_call.1} parent=23 // pred_region
          %s198 = smul.u32 2, %s14
          %p199 = scmp.lt.s32.totalorder %s198, 3
          %s200 = scalar_select %p199, %s198, 3
          %s201 = smul.addr %s200, 8
          %s202 = scalar_lea.vmem %s1, %s201
          %s203 = smul.u32 2, %s14
        $region32: #{tpu_custom_call.1} parent=23 // pred_fallthru
          _
        // Predicated region
        $region33: #{tpu_custom_call.1} parent=23 // pred_check
          %p204 = pneg %p86
        $region34: #{tpu_custom_call.1} parent=23 // pred_check_branch
          %206 = sbr.rel (%p204) target = $region36
        $region35: #{tpu_custom_call.1} parent=23 // pred_region
          %s207 = smul.u32 2, %s14
          %p208 = scmp.lt.s32.totalorder %s207, 3
          %s209 = scalar_select %p208, %s207, 3
          %s210 = smul.addr %s209, 8
          %s211 = scalar_lea.vmem %s2, %s210
          %s212 = smul.u32 2, %s14
        $region36: #{tpu_custom_call.1} parent=23 // pred_fallthru
          _
      $region24: #{tpu_custom_call.1} parent=5 // pred_fallthru
        _
      %p213 = scmp.le.s32.totalorder 1, %s14
      %p214 = scmp.lt.s32.totalorder %s14, 3
      %p215 = pnand %p213, %p214
      %p216 = pneg %p215
      // Predicated region
      $region37: #{tpu_custom_call.1} parent=5 // pred_check
        _
      $region38: #{tpu_custom_call.1} parent=5 // pred_check_branch
        %218 = sbr.rel (%p215) target = $region40
      $region39: #{tpu_custom_call.1} parent=5 // pred_region
        %s219 = ssub.s32 %s14, 1
        %s220 = smul.u32 2, %s19
        %p221 = scmp.lt.s32.totalorder %s220, 3
        %s222 = scalar_select %p221, %s220, 3
        %s223 = smul.addr %s222, 16
        %s224 = smul.addr %s223, 8
        %s225 = scalar_lea.vmem %s0, %s224
        %p226 = pneg %p40
        %p227 = pneg %p37
        %s228 = smul.u32 2, %s19
        %p229 = scmp.lt.s32.totalorder %s228, 3
        %s230 = scalar_select %p229, %s228, 3
        %s231 = smul.addr %s230, 8
        %s232 = scalar_lea.vmem %s1, %s231
        %p233 = pneg %p66
        %p234 = pneg %p63
        %s235 = smul.u32 2, %s19
        %p236 = scmp.lt.s32.totalorder %s235, 3
        %s237 = scalar_select %p236, %s235, 3
        %s238 = smul.addr %s237, 8
        %s239 = scalar_lea.vmem %s2, %s238
        %p240 = pneg %p92
        %p241 = pneg %p89
        %p242 = pneg %p113
        %p243 = pneg %p110
        %p244 = pneg %p134
        %p245 = pneg %p131
        %p246 = pneg %p160
        %p247 = pneg %p157
        %s248 = sand.u32 %s147, 1
        %s249 = scalar_lea.sflag [#allocation3], %s248
        %s250 = sand.u32 %s147, 1
        %s251 = smul.addr %s250, 16
        %s252 = scalar_lea.vmem [#allocation2], %s251
        %s253 = smul.u32 2, %s19
        %p254 = scmp.lt.s32.totalorder %s253, 3
        %s255 = scalar_select %p254, %s253, 3
        %s256 = smul.addr %s255, 16
        %s257 = smul.addr %s256, 8
        %s258 = scalar_lea.vmem %s0, %s257
        %s259 = smul.u32 2, %s19
        %s260 = smul.u32 2, %s19
        %p261 = scmp.lt.s32.totalorder %s260, 3
        %s262 = scalar_select %p261, %s260, 3
        %s263 = smul.addr %s262, 8
        %s264 = scalar_lea.vmem %s1, %s263
        %s265 = smul.u32 2, %s19
        %s266 = smul.u32 2, %s19
        %p267 = scmp.lt.s32.totalorder %s266, 3
        %s268 = scalar_select %p267, %s266, 3
        %s269 = smul.addr %s268, 8
        %s270 = scalar_lea.vmem %s2, %s269
        %s271 = smul.u32 2, %s19
        %s272 = smul.u32 2, %s19
        %v273 = vld [vmem:[%s258] sm:$0xff]
        %v274 = vld [vmem:[%s258 + $0x8] sm:$0xff]
        %v275 = vld [vmem:[%s258 + $0x10] sm:$0xff]
        %v276 = vld [vmem:[%s258 + $0x18] sm:$0xff]
        %v277 = vld [vmem:[%s258 + $0x20] sm:$0xff]
        %v278 = vld [vmem:[%s258 + $0x28] sm:$0xff]
        %v279 = vld [vmem:[%s258 + $0x30] sm:$0xff]
        %v280 = vld [vmem:[%s258 + $0x38] sm:$0xff]
        %v281 = vld [vmem:[%s258 + $0x40] sm:$0xff]
        %v282 = vld [vmem:[%s258 + $0x48] sm:$0xff]
        %v283 = vld [vmem:[%s258 + $0x50] sm:$0xff]
        %v284 = vld [vmem:[%s258 + $0x58] sm:$0xff]
        %v285 = vld [vmem:[%s258 + $0x60] sm:$0xff]
        %v286 = vld [vmem:[%s258 + $0x68] sm:$0xff]
        %v287 = vld [vmem:[%s258 + $0x70] sm:$0xff]
        %v288 = vld [vmem:[%s258 + $0x78] sm:$0xff]
        %v289 = vld [vmem:[%s258 + $0x80] sm:$0xff]
        %v290 = vld [vmem:[%s258 + $0x88] sm:$0xff]
        %v291 = vld [vmem:[%s258 + $0x90] sm:$0xff]
        %v292 = vld [vmem:[%s258 + $0x98] sm:$0xff]
        %v293 = vld [vmem:[%s258 + $0xa0] sm:$0xff]
        %v294 = vld [vmem:[%s258 + $0xa8] sm:$0xff]
        %v295 = vld [vmem:[%s258 + $0xb0] sm:$0xff]
        %v296 = vld [vmem:[%s258 + $0xb8] sm:$0xff]
        %v297 = vld [vmem:[%s258 + $0xc0] sm:$0xff]
        %v298 = vld [vmem:[%s258 + $0xc8] sm:$0xff]
        %v299 = vld [vmem:[%s258 + $0xd0] sm:$0xff]
        %v300 = vld [vmem:[%s258 + $0xd8] sm:$0xff]
        %v301 = vld [vmem:[%s258 + $0xe0] sm:$0xff]
        %v302 = vld [vmem:[%s258 + $0xe8] sm:$0xff]
        %v303 = vld [vmem:[%s258 + $0xf0] sm:$0xff]
        %v304 = vld [vmem:[%s258 + $0xf8] sm:$0xff]
        %v305 = vld [vmem:[%s3] sm:$0xff]
        %v306 = vld [vmem:[%s3 + $0x8] sm:$0xff]
        %vm307 = vcmask 130048
        %v309 = vsel %vm307, %v273, 0
        %v312 = vsel %vm307, %v274, 0
        %v315 = vsel %vm307, %v275, 0
        %v318 = vsel %vm307, %v276, 0
        %v321 = vsel %vm307, %v277, 0
        %v324 = vsel %vm307, %v278, 0
        %v327 = vsel %vm307, %v279, 0
        %v330 = vsel %vm307, %v280, 0
        %v333 = vsel %vm307, %v281, 0
        %v336 = vsel %vm307, %v282, 0
        %v339 = vsel %vm307, %v283, 0
        %v342 = vsel %vm307, %v284, 0
        %v345 = vsel %vm307, %v285, 0
        %v348 = vsel %vm307, %v286, 0
        %v351 = vsel %vm307, %v287, 0
        %v354 = vsel %vm307, %v288, 0
        %v357 = vsel %vm307, %v289, 0
        %v360 = vsel %vm307, %v290, 0
        %v363 = vsel %vm307, %v291, 0
        %v366 = vsel %vm307, %v292, 0
        %v369 = vsel %vm307, %v293, 0
        %v372 = vsel %vm307, %v294, 0
        %v375 = vsel %vm307, %v295, 0
        %v378 = vsel %vm307, %v296, 0
        %v381 = vsel %vm307, %v297, 0
        %v384 = vsel %vm307, %v298, 0
        %v387 = vsel %vm307, %v299, 0
        %v390 = vsel %vm307, %v300, 0
        %v393 = vsel %vm307, %v301, 0
        %v396 = vsel %vm307, %v302, 0
        %v399 = vsel %vm307, %v303, 0
        %v402 = vsel %vm307, %v304, 0
        %404 = vmatprep.subr.mxu0 0.0
        %405 = vmatpush1.msra.mxu0 0.0
        %406 = vmatprep.subr.mxu0 0.0
        %407 = vmatpush1.msra.mxu0 0.0
        %408 = vmatprep.subr.mxu0 0.0
        %409 = vmatpush1.msra.mxu0 0.0
        %410 = vmatprep.subr.mxu0 0.0
        %411 = vmatpush1.msra.mxu0 0.0
        %412 = vmatprep.subr.mxu0 0.0
        %413 = vmatpush1.msra.mxu0 0.0
        %414 = vmatprep.subr.mxu0 0.0
        %415 = vmatpush1.msra.mxu0 0.0
        %416 = vmatprep.subr.mxu0 0.0
        %417 = vmatpush1.msra.mxu0 0.0
        %418 = vmatprep.subr.mxu0 0.0
        %419 = vmatpush1.msra.mxu0 0.0
        %420 = vmatprep.subr.mxu0 0.0
        %421 = vmatpush1.msra.mxu0 0.0
        %422 = vmatprep.subr.mxu0 0.0
        %423 = vmatpush1.msra.mxu0 0.0
        %424 = vmatprep.subr.mxu0 0.0
        %425 = vmatpush1.msra.mxu0 0.0
        %426 = vmatprep.subr.mxu0 0.0
        %427 = vmatpush1.msra.mxu0 0.0
        %428 = vmatprep.subr.mxu0 0.0
        %429 = vmatpush1.msra.mxu0 0.0
        %430 = vmatprep.subr.mxu0 0.0
        %431 = vmatpush1.msra.mxu0 0.0
        %432 = vmatprep.subr.mxu0 0.0
        %433 = vmatpush1.msra.mxu0 %v306
        %434 = vmatprep.subr.mxu0 0.0
        %435 = vmatpush1.msra.mxu0 %v305
        %436 = vmatprep.subr.mxu0 0.0
        %437 = vmatpush2.msra.mxu0 0.0
        %438 = vmatprep.subr.mxu0 0.0
        %439 = vmatpush2.msra.mxu0 0.0
        %440 = vmatprep.subr.mxu0 0.0
        %441 = vmatpush2.msra.mxu0 0.0
        %442 = vmatprep.subr.mxu0 0.0
        %443 = vmatpush2.msra.mxu0 0.0
        %444 = vmatprep.subr.mxu0 0.0
        %445 = vmatpush2.msra.mxu0 0.0
        %446 = vmatprep.subr.mxu0 0.0
        %447 = vmatpush2.msra.mxu0 0.0
        %448 = vmatprep.subr.mxu0 0.0
        %449 = vmatpush2.msra.mxu0 0.0
        %450 = vmatprep.subr.mxu0 0.0
        %451 = vmatpush2.msra.mxu0 0.0
        %452 = vmatprep.subr.mxu0 0.0
        %453 = vmatpush2.msra.mxu0 0.0
        %454 = vmatprep.subr.mxu0 0.0
        %455 = vmatpush2.msra.mxu0 0.0
        %456 = vmatprep.subr.mxu0 0.0
        %457 = vmatpush2.msra.mxu0 0.0
        %458 = vmatprep.subr.mxu0 0.0
        %459 = vmatpush2.msra.mxu0 0.0
        %460 = vmatprep.subr.mxu0 0.0
        %461 = vmatpush2.msra.mxu0 0.0
        %462 = vmatprep.subr.mxu0 0.0
        %463 = vmatpush2.msra.mxu0 0.0
        %464 = vmatprep.subr.mxu0 0.0
        %465 = vmatpush2.msra.mxu0 0.0
        %466 = vmatprep.subr.mxu0 0.0
        %467 = vmatpush2.msra.mxu0 0.0
        %468 = vmatprep.mubr.f32.mxu0 0.0
        %469 = vmatmul.mubr.f32.gmra.mxu0 %v309
        %v470 = vpop.f32.mrf.mxu0
        %v471 = vadd.f32 0.0, %v470
        %v472 = vpop.f32.mrf.mxu0
        %473 = vmatprep.mubr.f32.mxu0 0.0
        %474 = vmatmul.mubr.f32.gmra.mxu0 %v312
        %v475 = vpop.f32.mrf.mxu0
        %v476 = vadd.f32 0.0, %v475
        %v477 = vpop.f32.mrf.mxu0
        %478 = vmatprep.mubr.f32.mxu0 0.0
        %479 = vmatmul.mubr.f32.gmra.mxu0 %v315
        %v480 = vpop.f32.mrf.mxu0
        %v481 = vadd.f32 0.0, %v480
        %v482 = vpop.f32.mrf.mxu0
        %483 = vmatprep.mubr.f32.mxu0 0.0
        %484 = vmatmul.mubr.f32.gmra.mxu0 %v318
        %v485 = vpop.f32.mrf.mxu0
        %v486 = vadd.f32 0.0, %v485
        %v487 = vpop.f32.mrf.mxu0
        %488 = vmatprep.mubr.f32.mxu0 0.0
        %489 = vmatmul.mubr.f32.gmra.mxu0 %v321
        %v490 = vpop.f32.mrf.mxu0
        %v491 = vadd.f32 0.0, %v490
        %v492 = vpop.f32.mrf.mxu0
        %493 = vmatprep.mubr.f32.mxu0 0.0
        %494 = vmatmul.mubr.f32.gmra.mxu0 %v324
        %v495 = vpop.f32.mrf.mxu0
        %v496 = vadd.f32 0.0, %v495
        %v497 = vpop.f32.mrf.mxu0
        %498 = vmatprep.mubr.f32.mxu0 0.0
        %499 = vmatmul.mubr.f32.gmra.mxu0 %v327
        %v500 = vpop.f32.mrf.mxu0
        %v501 = vadd.f32 0.0, %v500
        %v502 = vpop.f32.mrf.mxu0
        %503 = vmatprep.mubr.f32.mxu0 0.0
        %504 = vmatmul.mubr.f32.gmra.mxu0 %v330
        %v505 = vpop.f32.mrf.mxu0
        %v506 = vadd.f32 0.0, %v505
        %v507 = vpop.f32.mrf.mxu0
        %508 = vmatprep.mubr.f32.mxu0 0.0
        %509 = vmatmul.mubr.f32.gmra.mxu0 %v333
        %v510 = vpop.f32.mrf.mxu0
        %v511 = vadd.f32 0.0, %v510
        %v512 = vpop.f32.mrf.mxu0
        %513 = vmatprep.mubr.f32.mxu0 0.0
        %514 = vmatmul.mubr.f32.gmra.mxu0 %v336
        %v515 = vpop.f32.mrf.mxu0
        %v516 = vadd.f32 0.0, %v515
        %v517 = vpop.f32.mrf.mxu0
        %518 = vmatprep.mubr.f32.mxu0 0.0
        %519 = vmatmul.mubr.f32.gmra.mxu0 %v339
        %v520 = vpop.f32.mrf.mxu0
        %v521 = vadd.f32 0.0, %v520
        %v522 = vpop.f32.mrf.mxu0
        %523 = vmatprep.mubr.f32.mxu0 0.0
        %524 = vmatmul.mubr.f32.gmra.mxu0 %v342
        %v525 = vpop.f32.mrf.mxu0
        %v526 = vadd.f32 0.0, %v525
        %v527 = vpop.f32.mrf.mxu0
        %528 = vmatprep.mubr.f32.mxu0 0.0
        %529 = vmatmul.mubr.f32.gmra.mxu0 %v345
        %v530 = vpop.f32.mrf.mxu0
        %v531 = vadd.f32 0.0, %v530
        %v532 = vpop.f32.mrf.mxu0
        %533 = vmatprep.mubr.f32.mxu0 0.0
        %534 = vmatmul.mubr.f32.gmra.mxu0 %v348
        %v535 = vpop.f32.mrf.mxu0
        %v536 = vadd.f32 0.0, %v535
        %v537 = vpop.f32.mrf.mxu0
        %538 = vmatprep.mubr.f32.mxu0 0.0
        %539 = vmatmul.mubr.f32.gmra.mxu0 %v351
        %v540 = vpop.f32.mrf.mxu0
        %v541 = vadd.f32 0.0, %v540
        %v542 = vpop.f32.mrf.mxu0
        %543 = vmatprep.mubr.f32.mxu0 0.0
        %544 = vmatmul.mubr.f32.gmra.mxu0 %v354
        %v545 = vpop.f32.mrf.mxu0
        %v546 = vadd.f32 0.0, %v545
        %v547 = vpop.f32.mrf.mxu0
        %548 = vmatprep.mubr.f32.mxu0 0.0
        %549 = vmatmul.mubr.f32.gmra.mxu0 %v357
        %v550 = vpop.f32.mrf.mxu0
        %v551 = vadd.f32 0.0, %v550
        %v552 = vpop.f32.mrf.mxu0
        %553 = vmatprep.mubr.f32.mxu0 0.0
        %554 = vmatmul.mubr.f32.gmra.mxu0 %v360
        %v555 = vpop.f32.mrf.mxu0
        %v556 = vadd.f32 0.0, %v555
        %v557 = vpop.f32.mrf.mxu0
        %558 = vmatprep.mubr.f32.mxu0 0.0
        %559 = vmatmul.mubr.f32.gmra.mxu0 %v363
        %v560 = vpop.f32.mrf.mxu0
        %v561 = vadd.f32 0.0, %v560
        %v562 = vpop.f32.mrf.mxu0
        %563 = vmatprep.mubr.f32.mxu0 0.0
        %564 = vmatmul.mubr.f32.gmra.mxu0 %v366
        %v565 = vpop.f32.mrf.mxu0
        %v566 = vadd.f32 0.0, %v565
        %v567 = vpop.f32.mrf.mxu0
        %568 = vmatprep.mubr.f32.mxu0 0.0
        %569 = vmatmul.mubr.f32.gmra.mxu0 %v369
        %v570 = vpop.f32.mrf.mxu0
        %v571 = vadd.f32 0.0, %v570
        %v572 = vpop.f32.mrf.mxu0
        %573 = vmatprep.mubr.f32.mxu0 0.0
        %574 = vmatmul.mubr.f32.gmra.mxu0 %v372
        %v575 = vpop.f32.mrf.mxu0
        %v576 = vadd.f32 0.0, %v575
        %v577 = vpop.f32.mrf.mxu0
        %578 = vmatprep.mubr.f32.mxu0 0.0
        %579 = vmatmul.mubr.f32.gmra.mxu0 %v375
        %v580 = vpop.f32.mrf.mxu0
        %v581 = vadd.f32 0.0, %v580
        %v582 = vpop.f32.mrf.mxu0
        %583 = vmatprep.mubr.f32.mxu0 0.0
        %584 = vmatmul.mubr.f32.gmra.mxu0 %v378
        %v585 = vpop.f32.mrf.mxu0
        %v586 = vadd.f32 0.0, %v585
        %v587 = vpop.f32.mrf.mxu0
        %588 = vmatprep.mubr.f32.mxu0 0.0
        %589 = vmatmul.mubr.f32.gmra.mxu0 %v381
        %v590 = vpop.f32.mrf.mxu0
        %v591 = vadd.f32 0.0, %v590
        %v592 = vpop.f32.mrf.mxu0
        %593 = vmatprep.mubr.f32.mxu0 0.0
        %594 = vmatmul.mubr.f32.gmra.mxu0 %v384
        %v595 = vpop.f32.mrf.mxu0
        %v596 = vadd.f32 0.0, %v595
        %v597 = vpop.f32.mrf.mxu0
        %598 = vmatprep.mubr.f32.mxu0 0.0
        %599 = vmatmul.mubr.f32.gmra.mxu0 %v387
        %v600 = vpop.f32.mrf.mxu0
        %v601 = vadd.f32 0.0, %v600
        %v602 = vpop.f32.mrf.mxu0
        %603 = vmatprep.mubr.f32.mxu0 0.0
        %604 = vmatmul.mubr.f32.gmra.mxu0 %v390
        %v605 = vpop.f32.mrf.mxu0
        %v606 = vadd.f32 0.0, %v605
        %v607 = vpop.f32.mrf.mxu0
        %608 = vmatprep.mubr.f32.mxu0 0.0
        %609 = vmatmul.mubr.f32.gmra.mxu0 %v393
        %v610 = vpop.f32.mrf.mxu0
        %v611 = vadd.f32 0.0, %v610
        %v612 = vpop.f32.mrf.mxu0
        %613 = vmatprep.mubr.f32.mxu0 0.0
        %614 = vmatmul.mubr.f32.gmra.mxu0 %v396
        %v615 = vpop.f32.mrf.mxu0
        %v616 = vadd.f32 0.0, %v615
        %v617 = vpop.f32.mrf.mxu0
        %618 = vmatprep.mubr.f32.mxu0 0.0
        %619 = vmatmul.mubr.f32.gmra.mxu0 %v399
        %v620 = vpop.f32.mrf.mxu0
        %v621 = vadd.f32 0.0, %v620
        %v622 = vpop.f32.mrf.mxu0
        %623 = vmatprep.mubr.f32.mxu0 0.0
        %624 = vmatmul.mubr.f32.gmra.mxu0 %v402
        %v625 = vpop.f32.mrf.mxu0
        %v626 = vadd.f32 0.0, %v625
        %v627 = vpop.f32.mrf.mxu0
        %628 = vdwg.mxu0
        %v629 = vld [vmem:[%s264] sm:$0xff]
        %v630 = vld [vmem:[%s264 + $0x8] sm:$0xff]
        %v631 = vld [vmem:[%s4] sm:$0xff]
        %v632 = vld [vmem:[%s4 + $0x8] sm:$0xff]
        %v634 = vsel %vm307, %v629, 0
        %v637 = vsel %vm307, %v630, 0
        %639 = vmatprep.subr.mxu0 0.0
        %640 = vmatpush1.msra.mxu0 0.0
        %641 = vmatprep.subr.mxu0 0.0
        %642 = vmatpush1.msra.mxu0 0.0
        %643 = vmatprep.subr.mxu0 0.0
        %644 = vmatpush1.msra.mxu0 0.0
        %645 = vmatprep.subr.mxu0 0.0
        %646 = vmatpush1.msra.mxu0 0.0
        %647 = vmatprep.subr.mxu0 0.0
        %648 = vmatpush1.msra.mxu0 0.0
        %649 = vmatprep.subr.mxu0 0.0
        %650 = vmatpush1.msra.mxu0 0.0
        %651 = vmatprep.subr.mxu0 0.0
        %652 = vmatpush1.msra.mxu0 0.0
        %653 = vmatprep.subr.mxu0 0.0
        %654 = vmatpush1.msra.mxu0 0.0
        %655 = vmatprep.subr.mxu0 0.0
        %656 = vmatpush1.msra.mxu0 0.0
        %657 = vmatprep.subr.mxu0 0.0
        %658 = vmatpush1.msra.mxu0 0.0
        %659 = vmatprep.subr.mxu0 0.0
        %660 = vmatpush1.msra.mxu0 0.0
        %661 = vmatprep.subr.mxu0 0.0
        %662 = vmatpush1.msra.mxu0 0.0
        %663 = vmatprep.subr.mxu0 0.0
        %664 = vmatpush1.msra.mxu0 0.0
        %665 = vmatprep.subr.mxu0 0.0
        %666 = vmatpush1.msra.mxu0 0.0
        %667 = vmatprep.subr.mxu0 0.0
        %668 = vmatpush1.msra.mxu0 %v632
        %669 = vmatprep.subr.mxu0 0.0
        %670 = vmatpush1.msra.mxu0 %v631
        %671 = vmatprep.subr.mxu0 0.0
        %672 = vmatpush2.msra.mxu0 0.0
        %673 = vmatprep.subr.mxu0 0.0
        %674 = vmatpush2.msra.mxu0 0.0
        %675 = vmatprep.subr.mxu0 0.0
        %676 = vmatpush2.msra.mxu0 0.0
        %677 = vmatprep.subr.mxu0 0.0
        %678 = vmatpush2.msra.mxu0 0.0
        %679 = vmatprep.subr.mxu0 0.0
        %680 = vmatpush2.msra.mxu0 0.0
        %681 = vmatprep.subr.mxu0 0.0
        %682 = vmatpush2.msra.mxu0 0.0
        %683 = vmatprep.subr.mxu0 0.0
        %684 = vmatpush2.msra.mxu0 0.0
        %685 = vmatprep.subr.mxu0 0.0
        %686 = vmatpush2.msra.mxu0 0.0
        %687 = vmatprep.subr.mxu0 0.0
        %688 = vmatpush2.msra.mxu0 0.0
        %689 = vmatprep.subr.mxu0 0.0
        %690 = vmatpush2.msra.mxu0 0.0
        %691 = vmatprep.subr.mxu0 0.0
        %692 = vmatpush2.msra.mxu0 0.0
        %693 = vmatprep.subr.mxu0 0.0
        %694 = vmatpush2.msra.mxu0 0.0
        %695 = vmatprep.subr.mxu0 0.0
        %696 = vmatpush2.msra.mxu0 0.0
        %697 = vmatprep.subr.mxu0 0.0
        %698 = vmatpush2.msra.mxu0 0.0
        %699 = vmatprep.subr.mxu0 0.0
        %700 = vmatpush2.msra.mxu0 0.0
        %701 = vmatprep.subr.mxu0 0.0
        %702 = vmatpush2.msra.mxu0 0.0
        %703 = vmatprep.mubr.f32.mxu0 0.0
        %704 = vmatmul.mubr.f32.gmra.mxu0 %v634
        %v705 = vpop.f32.mrf.mxu0
        %v706 = vadd.f32 0.0, %v705
        %v707 = vpop.f32.mrf.mxu0
        %708 = vmatprep.mubr.f32.mxu0 0.0
        %709 = vmatmul.mubr.f32.gmra.mxu0 %v637
        %v710 = vpop.f32.mrf.mxu0
        %v711 = vadd.f32 0.0, %v710
        %v712 = vpop.f32.mrf.mxu0
        %713 = vdwg.mxu0
        %vm714 = vcmask 261120
        %v716 = vsel %vm714, %v706, 0
        %v719 = vsel %vm714, %v471, 0
        %v722 = vsel %vm714, %v476, 0
        %v725 = vsel %vm714, %v481, 0
        %v728 = vsel %vm714, %v486, 0
        %v731 = vsel %vm714, %v491, 0
        %v734 = vsel %vm714, %v496, 0
        %v737 = vsel %vm714, %v501, 0
        %v740 = vsel %vm714, %v506, 0
        %v743 = vsel %vm714, %v511, 0
        %v746 = vsel %vm714, %v516, 0
        %v749 = vsel %vm714, %v521, 0
        %v752 = vsel %vm714, %v526, 0
        %v755 = vsel %vm714, %v531, 0
        %v758 = vsel %vm714, %v536, 0
        %v761 = vsel %vm714, %v541, 0
        %v764 = vsel %vm714, %v546, 0
        %766 = vmatprep.subr.mxu0 0.0
        %767 = vmatpush1.xpose.msra.mxu0 %v764
        %768 = vmatprep.subr.mxu0 0.0
        %769 = vmatpush1.xpose.msra.mxu0 %v761
        %770 = vmatprep.subr.mxu0 0.0
        %771 = vmatpush1.xpose.msra.mxu0 %v758
        %772 = vmatprep.subr.mxu0 0.0
        %773 = vmatpush1.xpose.msra.mxu0 %v755
        %774 = vmatprep.subr.mxu0 0.0
        %775 = vmatpush1.xpose.msra.mxu0 %v752
        %776 = vmatprep.subr.mxu0 0.0
        %777 = vmatpush1.xpose.msra.mxu0 %v749
        %778 = vmatprep.subr.mxu0 0.0
        %779 = vmatpush1.xpose.msra.mxu0 %v746
        %780 = vmatprep.subr.mxu0 0.0
        %781 = vmatpush1.xpose.msra.mxu0 %v743
        %782 = vmatprep.subr.mxu0 0.0
        %783 = vmatpush1.xpose.msra.mxu0 %v740
        %784 = vmatprep.subr.mxu0 0.0
        %785 = vmatpush1.xpose.msra.mxu0 %v737
        %786 = vmatprep.subr.mxu0 0.0
        %787 = vmatpush1.xpose.msra.mxu0 %v734
        %788 = vmatprep.subr.mxu0 0.0
        %789 = vmatpush1.xpose.msra.mxu0 %v731
        %790 = vmatprep.subr.mxu0 0.0
        %791 = vmatpush1.xpose.msra.mxu0 %v728
        %792 = vmatprep.subr.mxu0 0.0
        %793 = vmatpush1.xpose.msra.mxu0 %v725
        %794 = vmatprep.subr.mxu0 0.0
        %795 = vmatpush1.xpose.msra.mxu0 %v722
        %796 = vmatprep.subr.mxu0 0.0
        %797 = vmatpush1.xpose.msra.mxu0 %v719
        %798 = vmatprep.subr.mxu0 0.0
        %799 = vmatpush2.xpose.msra.mxu0 0.0
        %800 = vmatprep.subr.mxu0 0.0
        %801 = vmatpush2.xpose.msra.mxu0 0.0
        %802 = vmatprep.subr.mxu0 0.0
        %803 = vmatpush2.xpose.msra.mxu0 0.0
        %804 = vmatprep.subr.mxu0 0.0
        %805 = vmatpush2.xpose.msra.mxu0 0.0
        %806 = vmatprep.subr.mxu0 0.0
        %807 = vmatpush2.xpose.msra.mxu0 0.0
        %808 = vmatprep.subr.mxu0 0.0
        %809 = vmatpush2.xpose.msra.mxu0 0.0
        %810 = vmatprep.subr.mxu0 0.0
        %811 = vmatpush2.xpose.msra.mxu0 0.0
        %812 = vmatprep.subr.mxu0 0.0
        %813 = vmatpush2.xpose.msra.mxu0 0.0
        %814 = vmatprep.subr.mxu0 0.0
        %815 = vmatpush2.xpose.msra.mxu0 0.0
        %816 = vmatprep.subr.mxu0 0.0
        %817 = vmatpush2.xpose.msra.mxu0 0.0
        %818 = vmatprep.subr.mxu0 0.0
        %819 = vmatpush2.xpose.msra.mxu0 0.0
        %820 = vmatprep.subr.mxu0 0.0
        %821 = vmatpush2.xpose.msra.mxu0 0.0
        %822 = vmatprep.subr.mxu0 0.0
        %823 = vmatpush2.xpose.msra.mxu0 0.0
        %824 = vmatprep.subr.mxu0 0.0
        %825 = vmatpush2.xpose.msra.mxu0 0.0
        %826 = vmatprep.subr.mxu0 0.0
        %827 = vmatpush2.xpose.msra.mxu0 0.0
        %828 = vmatprep.subr.mxu0 0.0
        %829 = vmatpush2.xpose.msra.mxu0 0.0
        %830 = vmatprep.mubr.f32.mxu0 0.0
        %831 = vmatmul.mubr.f32.gmra.mxu0 %v716
        %v832 = vpop.f32.mrf.mxu0
        %v833 = vadd.f32 0.0, %v832
        %v834 = vpop.f32.mrf.mxu0
        %835 = vdwg.mxu0
        %v837 = vsel %vm714, %v711, 0
        %v840 = vsel %vm714, %v551, 0
        %v843 = vsel %vm714, %v556, 0
        %v846 = vsel %vm714, %v561, 0
        %v849 = vsel %vm714, %v566, 0
        %v852 = vsel %vm714, %v571, 0
        %v855 = vsel %vm714, %v576, 0
        %v858 = vsel %vm714, %v581, 0
        %v861 = vsel %vm714, %v586, 0
        %v864 = vsel %vm714, %v591, 0
        %v867 = vsel %vm714, %v596, 0
        %v870 = vsel %vm714, %v601, 0
        %v873 = vsel %vm714, %v606, 0
        %v876 = vsel %vm714, %v611, 0
        %v879 = vsel %vm714, %v616, 0
        %v882 = vsel %vm714, %v621, 0
        %v885 = vsel %vm714, %v626, 0
        %887 = vmatprep.subr.mxu0 0.0
        %888 = vmatpush1.xpose.msra.mxu0 %v885
        %889 = vmatprep.subr.mxu0 0.0
        %890 = vmatpush1.xpose.msra.mxu0 %v882
        %891 = vmatprep.subr.mxu0 0.0
        %892 = vmatpush1.xpose.msra.mxu0 %v879
        %893 = vmatprep.subr.mxu0 0.0
        %894 = vmatpush1.xpose.msra.mxu0 %v876
        %895 = vmatprep.subr.mxu0 0.0
        %896 = vmatpush1.xpose.msra.mxu0 %v873
        %897 = vmatprep.subr.mxu0 0.0
        %898 = vmatpush1.xpose.msra.mxu0 %v870
        %899 = vmatprep.subr.mxu0 0.0
        %900 = vmatpush1.xpose.msra.mxu0 %v867
        %901 = vmatprep.subr.mxu0 0.0
        %902 = vmatpush1.xpose.msra.mxu0 %v864
        %903 = vmatprep.subr.mxu0 0.0
        %904 = vmatpush1.xpose.msra.mxu0 %v861
        %905 = vmatprep.subr.mxu0 0.0
        %906 = vmatpush1.xpose.msra.mxu0 %v858
        %907 = vmatprep.subr.mxu0 0.0
        %908 = vmatpush1.xpose.msra.mxu0 %v855
        %909 = vmatprep.subr.mxu0 0.0
        %910 = vmatpush1.xpose.msra.mxu0 %v852
        %911 = vmatprep.subr.mxu0 0.0
        %912 = vmatpush1.xpose.msra.mxu0 %v849
        %913 = vmatprep.subr.mxu0 0.0
        %914 = vmatpush1.xpose.msra.mxu0 %v846
        %915 = vmatprep.subr.mxu0 0.0
        %916 = vmatpush1.xpose.msra.mxu0 %v843
        %917 = vmatprep.subr.mxu0 0.0
        %918 = vmatpush1.xpose.msra.mxu0 %v840
        %919 = vmatprep.subr.mxu0 0.0
        %920 = vmatpush2.xpose.msra.mxu0 0.0
        %921 = vmatprep.subr.mxu0 0.0
        %922 = vmatpush2.xpose.msra.mxu0 0.0
        %923 = vmatprep.subr.mxu0 0.0
        %924 = vmatpush2.xpose.msra.mxu0 0.0
        %925 = vmatprep.subr.mxu0 0.0
        %926 = vmatpush2.xpose.msra.mxu0 0.0
        %927 = vmatprep.subr.mxu0 0.0
        %928 = vmatpush2.xpose.msra.mxu0 0.0
        %929 = vmatprep.subr.mxu0 0.0
        %930 = vmatpush2.xpose.msra.mxu0 0.0
        %931 = vmatprep.subr.mxu0 0.0
        %932 = vmatpush2.xpose.msra.mxu0 0.0
        %933 = vmatprep.subr.mxu0 0.0
        %934 = vmatpush2.xpose.msra.mxu0 0.0
        %935 = vmatprep.subr.mxu0 0.0
        %936 = vmatpush2.xpose.msra.mxu0 0.0
        %937 = vmatprep.subr.mxu0 0.0
        %938 = vmatpush2.xpose.msra.mxu0 0.0
        %939 = vmatprep.subr.mxu0 0.0
        %940 = vmatpush2.xpose.msra.mxu0 0.0
        %941 = vmatprep.subr.mxu0 0.0
        %942 = vmatpush2.xpose.msra.mxu0 0.0
        %943 = vmatprep.subr.mxu0 0.0
        %944 = vmatpush2.xpose.msra.mxu0 0.0
        %945 = vmatprep.subr.mxu0 0.0
        %946 = vmatpush2.xpose.msra.mxu0 0.0
        %947 = vmatprep.subr.mxu0 0.0
        %948 = vmatpush2.xpose.msra.mxu0 0.0
        %949 = vmatprep.subr.mxu0 0.0
        %950 = vmatpush2.xpose.msra.mxu0 0.0
        %951 = vmatprep.mubr.f32.mxu0 0.0
        %952 = vmatmul.mubr.f32.gmra.mxu0 %v837
        %v953 = vpop.f32.mrf.mxu0
        %v954 = vadd.f32 0.0, %v953
        %v955 = vpop.f32.mrf.mxu0
        %956 = vdwg.mxu0
        %v957 = vmul.f32 %v833, 0.17677669
        %v958 = vmul.f32 %v954, 0.17677669
        %v959 = vld [vmem:[%s270] sm:$0xff]
        %v960 = vld [vmem:[%s270 + $0x8] sm:$0xff]
        %vm961 = vcmp.ne.f32.partialorder %v959, 0.0
        %vm962 = vcmp.ne.f32.partialorder %v960, 0.0
        %v963 = vtanh.pop %v957
        %v964 = vtanh.pop %v958
        %v965 = vmul.f32 %v963, 10.0
        %v966 = vmul.f32 %v964, 10.0
        %v967 = vmul.f32 %v965, 1.442695
        %v968 = vpow.pop %v967
        %v969 = vmul.f32 %v966, 1.442695
        %v970 = vpow.pop %v969
        %v971 = vsel %vm961, %v968, 0.0
        %v972 = vsel %vm962, %v970, 0.0
        %973 = vadd.xlane.f32.xlu0 %v971
        %v974 = vpop.xlane.xlu0 %973
        %975 = vadd.xlane.f32.xlu0 %v972
        %v976 = vpop.xlane.xlu0 %975
        %v977 = vrcp.pop %v974
        %v978 = vrcp.pop %v976
        %v979 = vmul.f32 %v971, %v977
        %v980 = vmul.f32 %v972, %v978
        %981 = vst [vmem:[%s252] sm:$0xff] %v979
        %982 = vst [vmem:[%s252 + $0x8] sm:$0xff] %v980
        %s983 = sand.u32 %s147, 1
        %s984 = scalar_lea.sflag [#allocation3], %s983
        %s985 = sand.u32 %s147, 1
        %s986 = smul.addr %s985, 16
        %s987 = scalar_lea.vmem [#allocation2], %s986
        // Predicated region
        $region41: #{tpu_custom_call.1} parent=39 // pred_check
          %p988 = pneg %p157
        $region42: #{tpu_custom_call.1} parent=39 // pred_check_branch
          %990 = sbr.rel (%p988) target = $region44
        $region43: #{tpu_custom_call.1} parent=39 // pred_region
          %s991 = smul.u32 2, %s19
          %s993 = ssub.s32 256, 256
          %994 = vsyncadd %s984, %s993
          %s995 = smul.addr %s991, 128
          %s996 = scalar_lea.hbm %s5, %s995
          %s997 = sshll.u32 %s987, 4
          %s998 = int_to_ptr.vmem [resolvable:$true] %s997
          %1003 = dma.vmem_to_hbm [thread:$0]  %s998, 256, %s996, %s984, 128, 128, 8
        $region44: #{tpu_custom_call.1} parent=39 // pred_fallthru
          _
      $region40: #{tpu_custom_call.1} parent=5 // pred_fallthru
        _
      %p1004 = scmp.le.s32.totalorder 2, %s14
      // Predicated region
      $region45: #{tpu_custom_call.1} parent=5 // pred_check
        %p1005 = pneg %p1004
      $region46: #{tpu_custom_call.1} parent=5 // pred_check_branch
        %1007 = sbr.rel (%p1005) target = $region48
      $region47: #{tpu_custom_call.1} parent=5 // pred_region
        %s1008 = ssub.s32 %s14, 2
        // Predicated region
        $region49: #{tpu_custom_call.1} parent=47 // pred_check
          %p1009 = pneg %p163
        $region50: #{tpu_custom_call.1} parent=47 // pred_check_branch
          %1011 = sbr.rel (%p1009) target = $region52
        $region51: #{tpu_custom_call.1} parent=47 // pred_region
          %s1012 = sand.u32 %s148, 1
          %s1013 = scalar_lea.sflag [#allocation3], %s1012
          %s1014 = sand.u32 %s148, 1
          %s1015 = smul.addr %s1014, 16
          %s1016 = scalar_lea.vmem [#allocation2], %s1015
          %1017 = dma.done %s1013, 256
        $region52: #{tpu_custom_call.1} parent=47 // pred_fallthru
          _
      $region48: #{tpu_custom_call.1} parent=5 // pred_fallthru
        _
    $region6: #{tpu_custom_call.1} parent=1 // loop_footer
      %s18 = sadd.s32 1, %s14
    $region7: #{tpu_custom_call.1} parent=1 // loop_footer_branch
      %13 = sbr.rel target = $region3
    $region8: #{tpu_custom_call.1} parent=1 // loop_exit
      _
    %1018 = vsyncpa [#allocation3], 1
    %s1019 = scalar_lea.sflag [#allocation3], 1
    %1020 = vsyncpa %s1019, 1

</llo_original>
